<compile_context>
chip_gen: v6e
topology: v6e:2x2x1
jax: 0.10.0
libtpu: 0.0.40
codegen_flags: <defaults>
</compile_context>

<pallas_src>
import functools

import jax
import jax.numpy as jnp
from jax import lax
from jax.experimental import pallas as pl
from jax.experimental.pallas import tpu as pltpu


def _round_up(x, m):
    return -(-x // m) * m


def _physical_vmem_bytes():
    """Per-core physical VMEM (v5e/v6e: 128 MiB, v7x: 64 MiB).  Conservative fallback."""
    try:
        info = pltpu.get_tpu_info()
        v = getattr(info, "vmem_capacity_bytes", None)
        if v:
            return int(v)
    except Exception:
        pass
    return 64 << 20          # assume the smallest generation (v7x) if the query fails


def _spec(shape, index_map, *, buffers=None):
    """BlockSpec with optional deeper pipelining; falls back to the default (2 buffers)."""
    if buffers is not None and buffers != 2:
        try:
            return pl.BlockSpec(shape, index_map, pipeline_mode=pl.Buffered(buffers))
        except Exception:
            pass
    return pl.BlockSpec(shape, index_map)


def _plan_tiles(F, K, csize, tf_max, phys_vmem, n_hint):
    """Pick the feature tile `tf`, the transform's reduction split `n_par`, and F_pad."""
    f_round = _round_up(F, 128)
    # Per-tf-column VMEM bytes (3-deep buffered streams + in-kernel temporaries),
    # worst of the two streamed kernels; caps tf for large K / small-VMEM generations.
    per_tf = max(
        3 * n_hint * 4 + 3 * K * csize + n_hint * csize,      # transform step
        3 * K * csize + 3 * 4 + 3 * n_hint * 4,               # inverse-transform step
    )
    budget = min(phys_vmem // 2, 64 << 20)
    tf_cap = max(128, (budget // per_tf) // 128 * 128)
    tf = min(int(tf_max), f_round, tf_cap)
    tf = max(128, (tf // 128) * 128)          # guard: multiple of 128 regardless of tf_max
    # Split the transform's reduction across 2 "parallel" grid slots (keeps v7x's second
    # TensorCore busy) unless it would add noticeable zero-padding.
    n_par = 1
    if _round_up(F, tf) // tf >= 2:
        extra = _round_up(F, 2 * tf) - _round_up(F, tf)
        if extra * 8 <= _round_up(F, tf):
            n_par = 2
    f_pad = _round_up(F, tf * n_par)
    return tf, n_par, f_pad


# ---------------------------------------------------------------------------
# Streamed kernel 1: PCA transform partial sums
#   partial[p] = sum over this p's F tiles of  x_tile @ comp_tile.T   (f32)
# The (1, N, K) output block is the accumulator (constant index over the
# reduction axis); mean_proj is subtracted and partials summed in plain JAX.
# NOTE: the contraction is over the last dim of both operands (A @ B.T); if the
# bundle dump ever shows a per-step XLU vxpose of the (K, tf) tile on the
# critical path, pre-store a (F_pad, K) copy for this kernel instead.
# ---------------------------------------------------------------------------
def _transform_kernel(x_ref, comp_ref, part_ref):
    @pl.when(pl.program_id(1) == 0)
    def _():
        part_ref[...] = jnp.zeros_like(part_ref)

    cdt = comp_ref.dtype
    part_ref[...] += lax.dot_general(
        x_ref[...].astype(cdt), comp_ref[...],
        dimension_numbers=(((1,), (1,)), ((), ())),
        preferred_element_type=jnp.float32,
    )[None]


# ---------------------------------------------------------------------------
# Streamed kernel 2: PCA inverse transform -> recon tile = emb @ comp_tile + mean_tile
# Every F tile is independent ("parallel"); output tile is lane-dense.
# ---------------------------------------------------------------------------
def _inverse_kernel(emb_ref, mean_ref, comp_ref, recon_ref):
    cdt = comp_ref.dtype
    recon_ref[...] = (
        lax.dot_general(
            emb_ref[...].astype(cdt), comp_ref[...],
            dimension_numbers=(((1,), (0,)), ((), ())),
            preferred_element_type=jnp.float32,
        )
        + mean_ref[...]
    ).astype(recon_ref.dtype)


# ---------------------------------------------------------------------------
# Fused kernel: everything VMEM-resident (single-buffered, no grid).
# components is read from HBM exactly once and reused for both dots.
# ---------------------------------------------------------------------------
def _fused_kernel(x_ref, comp_ref, mean_ref, mean_proj_ref, recon_ref, emb_ref):
    cdt = comp_ref.dtype
    comp = comp_ref[...]
    emb = lax.dot_general(
        x_ref[...].astype(cdt), comp,
        dimension_numbers=(((1,), (1,)), ((), ())),
        preferred_element_type=jnp.float32,
    ) - mean_proj_ref[...]
    emb_ref[...] = emb
    recon_ref[...] = (
        lax.dot_general(
            emb.astype(cdt), comp,
            dimension_numbers=(((1,), (0,)), ((), ())),
            preferred_element_type=jnp.float32,
        )
        + mean_ref[...]
    ).astype(recon_ref.dtype)


def pca_transform(x_flat, mean_proj, components, *, tf, n_par, vmem_limit):
    """(x - mean) @ components.T via Pallas (hoisted mean).  x_flat: (N, F_pad)."""
    N, F = x_flat.shape
    K = components.shape[0]
    n_ft = F // (tf * n_par)
    partial = pl.pallas_call(
        _transform_kernel,
        out_shape=jax.ShapeDtypeStruct((n_par, N, K), jnp.float32),
        grid_spec=pltpu.PrefetchScalarGridSpec(
            num_scalar_prefetch=0,
            grid=(n_par, n_ft),
            in_specs=[
                _spec((N, tf), lambda p, f: (0, p * n_ft + f), buffers=3),   # x tile
                _spec((K, tf), lambda p, f: (0, p * n_ft + f), buffers=3),   # comp tile
            ],
            out_specs=pl.BlockSpec((1, N, K), lambda p, f: (p, 0, 0)),
        ),
        compiler_params=pltpu.CompilerParams(
            dimension_semantics=("parallel", "arbitrary"),
            vmem_limit_bytes=vmem_limit,
        ),
    )(x_flat, components)
    # Hoisted mean term: (x - mean) @ C^T == x @ C^T - mean @ C^T.
    return partial.sum(axis=0) - mean_proj


def pca_inverse_transform(embedding, mean_row, components, *, tf, vmem_limit):
    """embedding @ components + mean via Pallas.  Returns (N, F_pad) float32."""
    N, K = embedding.shape
    F = components.shape[1]
    n_ft = F // tf
    return pl.pallas_call(
        _inverse_kernel,
        out_shape=jax.ShapeDtypeStruct((N, F), jnp.float32),
        grid_spec=pltpu.PrefetchScalarGridSpec(
            num_scalar_prefetch=0,
            grid=(n_ft,),
            in_specs=[
                pl.BlockSpec((N, K), lambda f: (0, 0)),            # embedding (tiny, resident)
                _spec((1, tf), lambda f: (0, f), buffers=3),       # mean tile
                _spec((K, tf), lambda f: (0, f), buffers=3),       # comp tile
            ],
            out_specs=pl.BlockSpec((N, tf), lambda f: (0, f)),
        ),
        compiler_params=pltpu.CompilerParams(
            dimension_semantics=("parallel",),
            vmem_limit_bytes=vmem_limit,
        ),
    )(embedding, mean_row, components)


def pca_fused(x_flat, mean_row, mean_proj, components, *, vmem_limit):
    """Single-call fully VMEM-resident transform + inverse transform."""
    N, F = x_flat.shape
    K = components.shape[0]
    vmem = pl.BlockSpec(memory_space=pltpu.MemorySpace.VMEM)
    return pl.pallas_call(
        _fused_kernel,
        out_shape=(jax.ShapeDtypeStruct((N, F), jnp.float32),   # recon
                   jax.ShapeDtypeStruct((N, K), jnp.float32)),  # embedding
        in_specs=[vmem, vmem, vmem, vmem],
        out_specs=(vmem, vmem),
        compiler_params=pltpu.CompilerParams(vmem_limit_bytes=vmem_limit),
    )(x_flat, components, mean_row, mean_proj)


@functools.partial(
    jax.jit,
    static_argnames=("f_orig", "tf", "n_par", "fused", "stream_vmem", "fused_vmem"),
)
def _pca_forward_flat(x_flat, mean_row, mean_proj, components, *,
                      f_orig, tf, n_par, fused, stream_vmem, fused_vmem):
    f_pad = components.shape[1]
    if f_pad > f_orig:
        # TODO(synk): handle the ragged last F tile in-kernel (pl.ds + pl.when) so this
        # extra HBM pass over x disappears; padded component columns are already zero.
        x_flat = jnp.pad(x_flat, ((0, 0), (0, f_pad - f_orig)))
    if fused:
        recon_flat, emb = pca_fused(x_flat, mean_row, mean_proj, components,
                                    vmem_limit=fused_vmem)
    else:
        emb = pca_transform(x_flat, mean_proj, components,
                            tf=tf, n_par=n_par, vmem_limit=stream_vmem)
        recon_flat = pca_inverse_transform(emb, mean_row, components,
                                           tf=tf, vmem_limit=stream_vmem)
    return recon_flat[:, :f_orig], emb


class PCABrain2vecPallas:
    """JAX/Pallas equivalent of PCABrain2vec.forward.

    Holds PCA parameters padded to a multiple of the feature tile.  `param_dtype`
    controls the storage/streaming dtype of `components` (bf16 by default: halves
    the dominant HBM stream; use jnp.float32 for bit-faithful sklearn semantics).
    """

    # TODO(synk): from_pretrained (loading a pickled sklearn PCA from disk) has no
    # in-script Pallas equivalent; parameters are passed in directly here.

    def __init__(self, components, mean, input_shape, *, param_dtype=jnp.bfloat16,
                 tf_max=16384, use_fused=None, batch_hint=8):
        components = jnp.asarray(components, jnp.float32)
        mean = jnp.asarray(mean, jnp.float32)
        K, F = components.shape

        self.input_shape = tuple(input_shape)   # (D, H, W)
        self.F = F
        self.K = K
        self.param_dtype = jnp.dtype(param_dtype)
        self.csize = self.param_dtype.itemsize
        self.use_fused = use_fused
        self.phys = _physical_vmem_bytes()

        self.tf, self.n_par, self.f_pad = _plan_tiles(
            F, K, self.csize, tf_max, self.phys, batch_hint)

        pad = self.f_pad - F
        comp_f32 = jnp.pad(components, ((0, 0), (0, pad)))                 # (K, F_pad)
        self.components = comp_f32.astype(self.param_dtype)                # streamed dtype
        self.mean_row = jnp.pad(mean, (0, pad)).reshape(1, -1)             # (1, F_pad) f32
        # Hoisted mean term, computed against the components the kernels actually use:
        # (x - mean) @ C^T == x @ C^T - mean @ C^T.
        self.mean_proj = jnp.dot(self.mean_row,
                                 self.components.astype(jnp.float32).T)    # (1, K) f32

    # ---- per-call VMEM planning ------------------------------------------------
    def _stream_vmem_limit(self, n):
        cs, K, tf = self.csize, self.K, self.tf
        t_tr = 3 * n * tf * 4 + 3 * K * tf * cs + n * tf * cs
        t_inv = 3 * K * tf * cs + 3 * tf * 4 + 3 * n * tf * 4
        est = max(t_tr, t_inv) + (2 << 20)
        return int(min(max(est, 32 << 20), max(self.phys - (8 << 20), 16 << 20)))

    def _fused_plan(self, n):
        f_pad, K, cs = self.f_pad, self.K, self.csize
        arrays = (n * f_pad * 4 + K * f_pad * cs + f_pad * 4 + K * 4
                  + n * f_pad * 4 + n * K * 4)
        temps = n * f_pad * 2 + n * f_pad * 4
        est = arrays + temps + (2 << 20)
        fits = est <= int(self.phys * 0.7)
        limit = int(min(max(est + (8 << 20), 16 << 20),
                        max(self.phys - (8 << 20), 16 << 20)))
        return fits, limit

    # ---- forward ----------------------------------------------------------------
    def __call__(self, x):
        # x: (N, 1, D, H, W) float32
        n = x.shape[0]
        x_flat = jnp.reshape(x, (n, -1)).astype(jnp.float32)
        fits, fused_vmem = self._fused_plan(n)
        fused = fits if self.use_fused is None else bool(self.use_fused)
        stream_vmem = self._stream_vmem_limit(n)
        recon_flat, emb = _pca_forward_flat(
            x_flat, self.mean_row, self.mean_proj, self.components,
            f_orig=self.F, tf=self.tf, n_par=self.n_par, fused=fused,
            stream_vmem=stream_vmem, fused_vmem=fused_vmem,
        )
        recon = jnp.reshape(recon_flat, (n, 1, *self.input_shape))
        return recon, emb, None


if __name__ == "__main__":
    # Small shapes consistent with the module: (N, 1, D, H, W) volume, flattened
    # feature dim F = D*H*W (deliberately NOT a multiple of 128 to exercise padding),
    # K principal components.
    N = 2
    D, H, W = 10, 12, 10        # F = 1200
    K = 16
    F = D * H * W

    key = jax.random.PRNGKey(0)
    kx, kc, km = jax.random.split(key, 3)

    x = jax.random.normal(kx, (N, 1, D, H, W), dtype=jnp.float32)
    # Deterministic synthetic "PCA model" parameters (not a checkpoint load).
    components = jax.random.normal(kc, (K, F), dtype=jnp.float32) * 0.05
    mean = jax.random.normal(km, (F,), dtype=jnp.float32) * 0.1

    x_flat = jnp.reshape(x, (N, -1))

    # Exact f32 reference (original sklearn formulation).
    emb_f32 = (x_flat - mean[None, :]) @ components.T
    recon_f32 = (emb_f32 @ components + mean[None, :]).reshape(N, 1, D, H, W)

    # bf16-parameter reference: same math with bf16-quantized x / components
    # (matches the kernels' bf16 MXU inputs + f32 accumulation).
    compq = components.astype(jnp.bfloat16).astype(jnp.float32)
    xq = x_flat.astype(jnp.bfloat16).astype(jnp.float32)
    emb_q = xq @ compq.T - mean[None, :] @ compq.T
    recon_q = (emb_q.astype(jnp.bfloat16).astype(jnp.float32) @ compq
               + mean[None, :]).reshape(N, 1, D, H, W)

    # 1) Default config: bf16 params, auto path selection (fused / VMEM-resident here).
    model = PCABrain2vecPallas(components, mean, (D, H, W))
    recon, emb, none_out = model(x)
    jax.block_until_ready((recon, emb))
    assert recon.shape == (N, 1, D, H, W)
    assert emb.shape == (N, K)
    assert none_out is None
    assert jnp.allclose(emb, emb_q, atol=5e-3, rtol=5e-3)
    assert jnp.allclose(recon, recon_q, atol=5e-3, rtol=5e-3)

    # 2) Streamed (tiled) path with a tiny tile: exercises the multi-step grid, the
    #    two-way reduction split, and the non-multiple-of-128 tf_max guard.
    model_s = PCABrain2vecPallas(components, mean, (D, H, W),
                                 tf_max=200, use_fused=False)
    recon_s, emb_s, _ = model_s(x)
    jax.block_until_ready((recon_s, emb_s))
    assert jnp.allclose(emb_s, emb_q, atol=5e-3, rtol=5e-3)
    assert jnp.allclose(recon_s, recon_q, atol=5e-3, rtol=5e-3)

    # 3) f32-parameter streamed path vs. the exact f32 reference.
    model_f = PCABrain2vecPallas(components, mean, (D, H, W),
                                 param_dtype=jnp.float32, tf_max=256, use_fused=False)
    recon_f, emb_f, _ = model_f(x)
    jax.block_until_ready((recon_f, emb_f))
    assert jnp.allclose(emb_f, emb_f32, atol=1e-3, rtol=1e-3)
    assert jnp.allclose(recon_f, recon_f32, atol=1e-3, rtol=1e-3)

    print("KERNEL_OK")
</pallas_src>

<mosaic_0001>
module attributes {stable_mosaic.version = 11 : i64} {
  func.func @_fused_kernel(%arg0: memref<2x1280xf32, #tpu.memory_space<vmem>>, %arg1: memref<16x1280xbf16, #tpu.memory_space<vmem>>, %arg2: memref<1x1280xf32, #tpu.memory_space<vmem>>, %arg3: memref<1x16xf32, #tpu.memory_space<vmem>>, %arg4: memref<2x1280xf32, #tpu.memory_space<vmem>>, %arg5: memref<2x16xf32, #tpu.memory_space<vmem>>) attributes {dimension_semantics = [], scalar_prefetch = 0 : i64, scratch_operands = 0 : i64, tpu.core_type = #tpu.core_type<tc>} {
    %c0 = arith.constant 0 : index
    %c0_0 = arith.constant 0 : index
    %0 = vector.load %arg1[%c0, %c0_0] : memref<16x1280xbf16, #tpu.memory_space<vmem>>, vector<16x1280xbf16>
    %c0_1 = arith.constant 0 : index
    %c0_2 = arith.constant 0 : index
    %1 = vector.load %arg0[%c0_1, %c0_2] : memref<2x1280xf32, #tpu.memory_space<vmem>>, vector<2x1280xf32>
    %2 = arith.truncf %1 : vector<2x1280xf32> to vector<2x1280xbf16>
    %cst = arith.constant dense<0.000000e+00> : vector<2x16xf32>
    %3 = tpu.matmul %2, %0, %cst {dimension_numbers = #tpu.dot_dimension_numbers<[1], [1], [0], [0], [0, 0, 1, 0], [], []>} : vector<2x1280xbf16>, vector<16x1280xbf16>, vector<2x16xf32> -> vector<2x16xf32>
    %c0_3 = arith.constant 0 : index
    %c0_4 = arith.constant 0 : index
    %4 = vector.load %arg3[%c0_3, %c0_4] : memref<1x16xf32, #tpu.memory_space<vmem>>, vector<1x16xf32>
    %5 = vector.broadcast %4 : vector<1x16xf32> to vector<2x16xf32>
    %6 = arith.subf %3, %5 : vector<2x16xf32>
    %c0_5 = arith.constant 0 : index
    %c0_6 = arith.constant 0 : index
    %7 = vector.load %arg5[%c0_5, %c0_6] : memref<2x16xf32, #tpu.memory_space<vmem>>, vector<2x16xf32>
    tpu.vector_store %arg5[%c0_5, %c0_6], %6 {strides = array<i32>} : memref<2x16xf32, #tpu.memory_space<vmem>>, vector<2x16xf32>,
    %8 = arith.truncf %6 : vector<2x16xf32> to vector<2x16xbf16>
    %cst_7 = arith.constant dense<0.000000e+00> : vector<2x1280xf32>
    %9 = tpu.matmul %8, %0, %cst_7 {dimension_numbers = #tpu.dot_dimension_numbers<[1], [0], [0], [1], [0, 0, 1, 1], [], []>} : vector<2x16xbf16>, vector<16x1280xbf16>, vector<2x1280xf32> -> vector<2x1280xf32>
    %c0_8 = arith.constant 0 : index
    %c0_9 = arith.constant 0 : index
    %10 = vector.load %arg2[%c0_8, %c0_9] : memref<1x1280xf32, #tpu.memory_space<vmem>>, vector<1x1280xf32>
    %11 = vector.broadcast %10 : vector<1x1280xf32> to vector<2x1280xf32>
    %12 = arith.addf %9, %11 : vector<2x1280xf32>
    %c0_10 = arith.constant 0 : index
    %c0_11 = arith.constant 0 : index
    %13 = vector.load %arg4[%c0_10, %c0_11] : memref<2x1280xf32, #tpu.memory_space<vmem>>, vector<2x1280xf32>
    tpu.vector_store %arg4[%c0_10, %c0_11], %12 {strides = array<i32>} : memref<2x1280xf32, #tpu.memory_space<vmem>>, vector<2x1280xf32>,
    return
  }
}

</mosaic_0001>

<llo_original>
// kernel: _pca_forward_flat.1
$region0: #{_pca_forward_flat.1}
  #allocation0 [shape = 'u32[]', space=smem, size = 0x4, offset = 0x4, fixed_abs, tag = 'smem constant byte address 0x4 - core index']
  #allocation1 [shape = 'u32[144,128]{1,0:T(1,128)}', space=vmem, size = 0x12000, scoped, tag = 'internal scratch']
  %s0 = inlined_call_operand.vmem [shape: f32[2,1280], index: 0, kind: input, shape index: {}]
  %s1 = inlined_call_operand.hbm [shape: bf16[16,1280], index: 1, kind: input, shape index: {}]
  %s2 = inlined_call_operand.vmem [shape: f32[1,1280], index: 2, kind: input, shape index: {}]
  %s3 = inlined_call_operand.vmem [shape: f32[1,16], index: 3, kind: input, shape index: {}]
  %s4 = inlined_call_operand.hbm [shape: f32[2,1280], index: 4, kind: output, shape index: {0}]
  %s5 = inlined_call_operand.hbm [shape: f32[2,16], index: 5, kind: output, shape index: {1}]
  %6 = xla_tuple %s4, %s5
  %s7 = sld [smem:[#allocation0]]
  $region38: #{_pca_forward_flat.1} parent=0
    _
  %s9 = ssub.s32 1, %s7
  %s10 = scalar_select 0, %s9, %s7
  $region1: #{_pca_forward_flat.1} parent=0
    #allocation2 [shape = 'u8[40960]{0}', space=vmem, size = 0xa000, scoped, tag = 'input window, operand 1, single buffered']
    #allocation3 [shape = 's32[1]{0}', space=sflag, size = 0x4, scoped, tag = 'scoped memory for _pca_forward_flat.1']
    #allocation4 [shape = 's32[1]{0}', space=sflag, size = 0x4, scoped, tag = 'scoped memory for _pca_forward_flat.1']
    #allocation5 [shape = 'u8[10240]{0}', space=vmem, size = 0x2800, scoped, tag = 'output window, operand 0, single buffered']
    #allocation6 [shape = 'u8[1024]{0}', space=vmem, size = 0x400, scoped, tag = 'output window, operand 1, single buffered']
    #allocation7 [shape = 's32[1]{0}', space=sflag, size = 0x4, scoped, tag = 'scoped memory for _pca_forward_flat.1']
    %11 = vsyncpa [#allocation3], 0
    %12 = vsyncpa [#allocation4], 0
    %13 = vsyncpa [#allocation7], 0
    // Predicated region
    $region2: #{_pca_forward_flat.1} parent=1 // pred_check
      _
    $region3: #{_pca_forward_flat.1} parent=1 // pred_check_branch
      %15 = sbr.rel (0) target = $region5
    $region4: #{_pca_forward_flat.1} parent=1 // pred_region
      _
    $region5: #{_pca_forward_flat.1} parent=1 // pred_fallthru
      _
    // Predicated region
    $region6: #{_pca_forward_flat.1} parent=1 // pred_check
      _
    $region7: #{_pca_forward_flat.1} parent=1 // pred_check_branch
      %17 = sbr.rel (0) target = $region9
    $region8: #{_pca_forward_flat.1} parent=1 // pred_region
      %s19 = ssub.s32 1280, 1280
      %20 = vsyncadd [#allocation3], %s19
      %s21 = sshll.u32 [#allocation2], 4
      %s22 = int_to_ptr.vmem [resolvable:$true] %s21
      %27 = dma.hbm_to_vmem [thread:$0]  %s1, 1280, %s22, [#allocation3], 640, 640, 40
    $region9: #{_pca_forward_flat.1} parent=1 // pred_fallthru
      _
    // Predicated region
    $region10: #{_pca_forward_flat.1} parent=1 // pred_check
      _
    $region11: #{_pca_forward_flat.1} parent=1 // pred_check_branch
      %29 = sbr.rel (0) target = $region13
    $region12: #{_pca_forward_flat.1} parent=1 // pred_region
      _
    $region13: #{_pca_forward_flat.1} parent=1 // pred_fallthru
      _
    // Predicated region
    $region14: #{_pca_forward_flat.1} parent=1 // pred_check
      _
    $region15: #{_pca_forward_flat.1} parent=1 // pred_check_branch
      %31 = sbr.rel (0) target = $region17
    $region16: #{_pca_forward_flat.1} parent=1 // pred_region
      _
    $region17: #{_pca_forward_flat.1} parent=1 // pred_fallthru
      _
    // Predicated region
    $region18: #{_pca_forward_flat.1} parent=1 // pred_check
      _
    $region19: #{_pca_forward_flat.1} parent=1 // pred_check_branch
      %33 = sbr.rel (0) target = $region21
    $region20: #{_pca_forward_flat.1} parent=1 // pred_region
      %34 = dma.done [#allocation3], 1280
    $region21: #{_pca_forward_flat.1} parent=1 // pred_fallthru
      _
    %v36 = vld [vmem:[#allocation2] sm:$0xff]
    %v37 = vld [vmem:[#allocation2 + $0x8] sm:$0xff]
    %v38 = vld [vmem:[#allocation2 + $0x10] sm:$0xff]
    %v39 = vld [vmem:[#allocation2 + $0x18] sm:$0xff]
    %v40 = vld [vmem:[#allocation2 + $0x20] sm:$0xff]
    %v41 = vld [vmem:[#allocation2 + $0x28] sm:$0xff]
    %v42 = vld [vmem:[#allocation2 + $0x30] sm:$0xff]
    %v43 = vld [vmem:[#allocation2 + $0x38] sm:$0xff]
    %v44 = vld [vmem:[#allocation2 + $0x40] sm:$0xff]
    %v45 = vld [vmem:[#allocation2 + $0x48] sm:$0xff]
    %v46 = vld [vmem:[%s0] sm:$0xff]
    %v47 = vld [vmem:[%s0 + $0x8] sm:$0xff]
    %v48 = vld [vmem:[%s0 + $0x10] sm:$0xf]
    %v52 = vcombine.high %v46, %v46
    %v54 = vunpack.c.l.s4 1983009808
    %v55 = vunpack.c.0.s8 %v54
    %v56 = vlaneseq
    %v57 = vshrl.u32 %v56, 7
    %v58 = vsub.s32 %v55, %v57
    %v59 = vrot.slane %v46, %v58
    %v61 = vunpack.c.l.s4 1983009808
    %v62 = vunpack.c.0.s8 %v61
    %v63 = vlaneseq
    %v64 = vshrl.u32 %v63, 7
    %v65 = vsub.s32 %v62, %v64
    %v66 = vrot.slane %v52, %v65
    %v67 = vcombine.high %v59, %v59
    %v68 = vcombine.high %v66, %v66
    %v69 = vcombine.high %v47, %v47
    %v71 = vunpack.c.l.s4 1983009808
    %v72 = vunpack.c.0.s8 %v71
    %v73 = vlaneseq
    %v74 = vshrl.u32 %v73, 7
    %v75 = vsub.s32 %v72, %v74
    %v76 = vrot.slane %v47, %v75
    %v78 = vunpack.c.l.s4 1983009808
    %v79 = vunpack.c.0.s8 %v78
    %v80 = vlaneseq
    %v81 = vshrl.u32 %v80, 7
    %v82 = vsub.s32 %v79, %v81
    %v83 = vrot.slane %v69, %v82
    %v84 = vcombine.high %v76, %v76
    %v85 = vcombine.high %v83, %v83
    %v87 = vunpack.c.l.s4 1983009808
    %v88 = vunpack.c.0.s8 %v87
    %v89 = vlaneseq
    %v90 = vshrl.u32 %v89, 7
    %v91 = vsub.s32 %v88, %v90
    %v92 = vrot.slane %v48, %v91
    %v93 = vcombine.high %v92, %v92
    %v104 = vpack.c.bf16 %v59, %v59
    %v105 = vpack.c.bf16 %v67, %v67
    %v106 = vpack.c.bf16 %v66, %v66
    %v107 = vpack.c.bf16 %v68, %v68
    %v108 = vpack.c.bf16 %v76, %v76
    %v109 = vpack.c.bf16 %v84, %v84
    %v110 = vpack.c.bf16 %v83, %v83
    %v111 = vpack.c.bf16 %v85, %v85
    %v112 = vpack.c.bf16 %v92, %v92
    %v113 = vpack.c.bf16 %v93, %v93
    %v124 = vunpack.c.l.b16 %v36
    %v125 = vunpack.c.h.b16 %v36
    %v126 = vunpack.c.l.b16 %v37
    %v127 = vunpack.c.h.b16 %v37
    %v128 = vunpack.c.l.b16 %v38
    %v129 = vunpack.c.h.b16 %v38
    %v130 = vunpack.c.l.b16 %v39
    %v131 = vunpack.c.h.b16 %v39
    %v132 = vunpack.c.l.b16 %v40
    %v133 = vunpack.c.h.b16 %v40
    %v134 = vunpack.c.l.b16 %v41
    %v135 = vunpack.c.h.b16 %v41
    %v136 = vunpack.c.l.b16 %v42
    %v137 = vunpack.c.h.b16 %v42
    %v138 = vunpack.c.l.b16 %v43
    %v139 = vunpack.c.h.b16 %v43
    %v140 = vunpack.c.l.b16 %v44
    %v141 = vunpack.c.h.b16 %v44
    %v142 = vunpack.c.l.b16 %v45
    %v143 = vunpack.c.h.b16 %v45
    %v144 = vpack.c.b16 %v134, %v124
    %v145 = vpack.c.b16 %v135, %v125
    %v146 = vpack.c.b16 %v136, %v126
    %v147 = vpack.c.b16 %v137, %v127
    %v148 = vpack.c.b16 %v138, %v128
    %v149 = vpack.c.b16 %v139, %v129
    %v150 = vpack.c.b16 %v140, %v130
    %v151 = vpack.c.b16 %v141, %v131
    %v152 = vpack.c.b16 %v142, %v132
    %v153 = vpack.c.b16 %v143, %v133
    %164 = vmatprep.subr.bf16.mxu0 0
    %165 = vmatpush1.bf16.xpose.msra.mxu0 0
    %166 = vmatprep.subr.bf16.mxu0 0
    %167 = vmatpush1.bf16.xpose.msra.mxu0 0
    %168 = vmatprep.subr.bf16.mxu0 0
    %169 = vmatpush1.bf16.xpose.msra.mxu0 0
    %170 = vmatprep.subr.bf16.mxu0 0
    %171 = vmatpush1.bf16.xpose.msra.mxu0 0
    %172 = vmatprep.subr.bf16.mxu0 0
    %173 = vmatpush1.bf16.xpose.msra.mxu0 0
    %174 = vmatprep.subr.bf16.mxu0 0
    %175 = vmatpush1.bf16.xpose.msra.mxu0 0
    %176 = vmatprep.subr.bf16.mxu0 0
    %177 = vmatpush1.bf16.xpose.msra.mxu0 0
    %178 = vmatprep.subr.bf16.mxu0 %v145
    %179 = vmatpush1.bf16.xpose.msra.mxu0 %v144
    %180 = vmatprep.subr.bf16.mxu0 0
    %181 = vmatpush2.bf16.xpose.msra.mxu0 0
    %182 = vmatprep.subr.bf16.mxu0 0
    %183 = vmatpush2.bf16.xpose.msra.mxu0 0
    %184 = vmatprep.subr.bf16.mxu0 0
    %185 = vmatpush2.bf16.xpose.msra.mxu0 0
    %186 = vmatprep.subr.bf16.mxu0 0
    %187 = vmatpush2.bf16.xpose.msra.mxu0 0
    %188 = vmatprep.subr.bf16.mxu0 0
    %189 = vmatpush2.bf16.xpose.msra.mxu0 0
    %190 = vmatprep.subr.bf16.mxu0 0
    %191 = vmatpush2.bf16.xpose.msra.mxu0 0
    %192 = vmatprep.subr.bf16.mxu0 0
    %193 = vmatpush2.bf16.xpose.msra.mxu0 0
    %194 = vmatprep.subr.bf16.mxu0 0
    %195 = vmatpush2.bf16.xpose.msra.mxu0 0
    %196 = vmatprep.mubr.bf16.mxu0 %v105
    %197 = vmatmul.mubr.bf16.gmra.mxu0 %v104
    %v198 = vpop.f32.mrf.mxu0
    %v199 = vadd.f32 0.0, %v198
    %v200 = vpop.f32.mrf.mxu0
    %v201 = vpop.f32.mrf.mxu0
    %v202 = vpop.f32.mrf.mxu0
    %203 = vdwg.mxu0
    %204 = vmatprep.subr.bf16.mxu0 0
    %205 = vmatpush1.bf16.xpose.msra.mxu0 0
    %206 = vmatprep.subr.bf16.mxu0 0
    %207 = vmatpush1.bf16.xpose.msra.mxu0 0
    %208 = vmatprep.subr.bf16.mxu0 0
    %209 = vmatpush1.bf16.xpose.msra.mxu0 0
    %210 = vmatprep.subr.bf16.mxu0 0
    %211 = vmatpush1.bf16.xpose.msra.mxu0 0
    %212 = vmatprep.subr.bf16.mxu0 0
    %213 = vmatpush1.bf16.xpose.msra.mxu0 0
    %214 = vmatprep.subr.bf16.mxu0 0
    %215 = vmatpush1.bf16.xpose.msra.mxu0 0
    %216 = vmatprep.subr.bf16.mxu0 0
    %217 = vmatpush1.bf16.xpose.msra.mxu0 0
    %218 = vmatprep.subr.bf16.mxu0 %v147
    %219 = vmatpush1.bf16.xpose.msra.mxu0 %v146
    %220 = vmatprep.subr.bf16.mxu0 0
    %221 = vmatpush2.bf16.xpose.msra.mxu0 0
    %222 = vmatprep.subr.bf16.mxu0 0
    %223 = vmatpush2.bf16.xpose.msra.mxu0 0
    %224 = vmatprep.subr.bf16.mxu0 0
    %225 = vmatpush2.bf16.xpose.msra.mxu0 0
    %226 = vmatprep.subr.bf16.mxu0 0
    %227 = vmatpush2.bf16.xpose.msra.mxu0 0
    %228 = vmatprep.subr.bf16.mxu0 0
    %229 = vmatpush2.bf16.xpose.msra.mxu0 0
    %230 = vmatprep.subr.bf16.mxu0 0
    %231 = vmatpush2.bf16.xpose.msra.mxu0 0
    %232 = vmatprep.subr.bf16.mxu0 0
    %233 = vmatpush2.bf16.xpose.msra.mxu0 0
    %234 = vmatprep.subr.bf16.mxu0 0
    %235 = vmatpush2.bf16.xpose.msra.mxu0 0
    %236 = vmatprep.mubr.bf16.mxu0 %v107
    %237 = vmatmul.mubr.bf16.gmra.mxu0 %v106
    %v238 = vpop.f32.mrf.mxu0
    %v239 = vadd.f32 %v199, %v238
    %v240 = vpop.f32.mrf.mxu0
    %v241 = vpop.f32.mrf.mxu0
    %v242 = vpop.f32.mrf.mxu0
    %243 = vdwg.mxu0
    %244 = vmatprep.subr.bf16.mxu0 0
    %245 = vmatpush1.bf16.xpose.msra.mxu0 0
    %246 = vmatprep.subr.bf16.mxu0 0
    %247 = vmatpush1.bf16.xpose.msra.mxu0 0
    %248 = vmatprep.subr.bf16.mxu0 0
    %249 = vmatpush1.bf16.xpose.msra.mxu0 0
    %250 = vmatprep.subr.bf16.mxu0 0
    %251 = vmatpush1.bf16.xpose.msra.mxu0 0
    %252 = vmatprep.subr.bf16.mxu0 0
    %253 = vmatpush1.bf16.xpose.msra.mxu0 0
    %254 = vmatprep.subr.bf16.mxu0 0
    %255 = vmatpush1.bf16.xpose.msra.mxu0 0
    %256 = vmatprep.subr.bf16.mxu0 0
    %257 = vmatpush1.bf16.xpose.msra.mxu0 0
    %258 = vmatprep.subr.bf16.mxu0 %v149
    %259 = vmatpush1.bf16.xpose.msra.mxu0 %v148
    %260 = vmatprep.subr.bf16.mxu0 0
    %261 = vmatpush2.bf16.xpose.msra.mxu0 0
    %262 = vmatprep.subr.bf16.mxu0 0
    %263 = vmatpush2.bf16.xpose.msra.mxu0 0
    %264 = vmatprep.subr.bf16.mxu0 0
    %265 = vmatpush2.bf16.xpose.msra.mxu0 0
    %266 = vmatprep.subr.bf16.mxu0 0
    %267 = vmatpush2.bf16.xpose.msra.mxu0 0
    %268 = vmatprep.subr.bf16.mxu0 0
    %269 = vmatpush2.bf16.xpose.msra.mxu0 0
    %270 = vmatprep.subr.bf16.mxu0 0
    %271 = vmatpush2.bf16.xpose.msra.mxu0 0
    %272 = vmatprep.subr.bf16.mxu0 0
    %273 = vmatpush2.bf16.xpose.msra.mxu0 0
    %274 = vmatprep.subr.bf16.mxu0 0
    %275 = vmatpush2.bf16.xpose.msra.mxu0 0
    %276 = vmatprep.mubr.bf16.mxu0 %v109
    %277 = vmatmul.mubr.bf16.gmra.mxu0 %v108
    %v278 = vpop.f32.mrf.mxu0
    %v279 = vadd.f32 %v239, %v278
    %v280 = vpop.f32.mrf.mxu0
    %v281 = vpop.f32.mrf.mxu0
    %v282 = vpop.f32.mrf.mxu0
    %283 = vdwg.mxu0
    %284 = vmatprep.subr.bf16.mxu0 0
    %285 = vmatpush1.bf16.xpose.msra.mxu0 0
    %286 = vmatprep.subr.bf16.mxu0 0
    %287 = vmatpush1.bf16.xpose.msra.mxu0 0
    %288 = vmatprep.subr.bf16.mxu0 0
    %289 = vmatpush1.bf16.xpose.msra.mxu0 0
    %290 = vmatprep.subr.bf16.mxu0 0
    %291 = vmatpush1.bf16.xpose.msra.mxu0 0
    %292 = vmatprep.subr.bf16.mxu0 0
    %293 = vmatpush1.bf16.xpose.msra.mxu0 0
    %294 = vmatprep.subr.bf16.mxu0 0
    %295 = vmatpush1.bf16.xpose.msra.mxu0 0
    %296 = vmatprep.subr.bf16.mxu0 0
    %297 = vmatpush1.bf16.xpose.msra.mxu0 0
    %298 = vmatprep.subr.bf16.mxu0 %v151
    %299 = vmatpush1.bf16.xpose.msra.mxu0 %v150
    %300 = vmatprep.subr.bf16.mxu0 0
    %301 = vmatpush2.bf16.xpose.msra.mxu0 0
    %302 = vmatprep.subr.bf16.mxu0 0
    %303 = vmatpush2.bf16.xpose.msra.mxu0 0
    %304 = vmatprep.subr.bf16.mxu0 0
    %305 = vmatpush2.bf16.xpose.msra.mxu0 0
    %306 = vmatprep.subr.bf16.mxu0 0
    %307 = vmatpush2.bf16.xpose.msra.mxu0 0
    %308 = vmatprep.subr.bf16.mxu0 0
    %309 = vmatpush2.bf16.xpose.msra.mxu0 0
    %310 = vmatprep.subr.bf16.mxu0 0
    %311 = vmatpush2.bf16.xpose.msra.mxu0 0
    %312 = vmatprep.subr.bf16.mxu0 0
    %313 = vmatpush2.bf16.xpose.msra.mxu0 0
    %314 = vmatprep.subr.bf16.mxu0 0
    %315 = vmatpush2.bf16.xpose.msra.mxu0 0
    %316 = vmatprep.mubr.bf16.mxu0 %v111
    %317 = vmatmul.mubr.bf16.gmra.mxu0 %v110
    %v318 = vpop.f32.mrf.mxu0
    %v319 = vadd.f32 %v279, %v318
    %v320 = vpop.f32.mrf.mxu0
    %v321 = vpop.f32.mrf.mxu0
    %v322 = vpop.f32.mrf.mxu0
    %323 = vdwg.mxu0
    %324 = vmatprep.subr.bf16.mxu0 0
    %325 = vmatpush1.bf16.xpose.msra.mxu0 0
    %326 = vmatprep.subr.bf16.mxu0 0
    %327 = vmatpush1.bf16.xpose.msra.mxu0 0
    %328 = vmatprep.subr.bf16.mxu0 0
    %329 = vmatpush1.bf16.xpose.msra.mxu0 0
    %330 = vmatprep.subr.bf16.mxu0 0
    %331 = vmatpush1.bf16.xpose.msra.mxu0 0
    %332 = vmatprep.subr.bf16.mxu0 0
    %333 = vmatpush1.bf16.xpose.msra.mxu0 0
    %334 = vmatprep.subr.bf16.mxu0 0
    %335 = vmatpush1.bf16.xpose.msra.mxu0 0
    %336 = vmatprep.subr.bf16.mxu0 0
    %337 = vmatpush1.bf16.xpose.msra.mxu0 0
    %338 = vmatprep.subr.bf16.mxu0 %v153
    %339 = vmatpush1.bf16.xpose.msra.mxu0 %v152
    %340 = vmatprep.subr.bf16.mxu0 0
    %341 = vmatpush2.bf16.xpose.msra.mxu0 0
    %342 = vmatprep.subr.bf16.mxu0 0
    %343 = vmatpush2.bf16.xpose.msra.mxu0 0
    %344 = vmatprep.subr.bf16.mxu0 0
    %345 = vmatpush2.bf16.xpose.msra.mxu0 0
    %346 = vmatprep.subr.bf16.mxu0 0
    %347 = vmatpush2.bf16.xpose.msra.mxu0 0
    %348 = vmatprep.subr.bf16.mxu0 0
    %349 = vmatpush2.bf16.xpose.msra.mxu0 0
    %350 = vmatprep.subr.bf16.mxu0 0
    %351 = vmatpush2.bf16.xpose.msra.mxu0 0
    %352 = vmatprep.subr.bf16.mxu0 0
    %353 = vmatpush2.bf16.xpose.msra.mxu0 0
    %354 = vmatprep.subr.bf16.mxu0 0
    %355 = vmatpush2.bf16.xpose.msra.mxu0 0
    %356 = vmatprep.mubr.bf16.mxu0 %v113
    %357 = vmatmul.mubr.bf16.gmra.mxu0 %v112
    %v358 = vpop.f32.mrf.mxu0
    %v359 = vadd.f32 %v319, %v358
    %v360 = vpop.f32.mrf.mxu0
    %v361 = vpop.f32.mrf.mxu0
    %v362 = vpop.f32.mrf.mxu0
    %363 = vdwg.mxu0
    %v364 = vld [vmem:[%s3] sm:$0x1]
    %v366 = vlaneseq
    %v367 = vshrl.u32 %v366, 7
    %v368 = vsub.s32 0, %v367
    %v369 = vrot.slane %v364, %v368
    %v371 = vsub.f32 %v359, %v369
    %vm372 = vcmask 123904
    %373 = vst.msk [vmem:[#allocation6] sm:$0x3] %vm372, %v371
    %v374 = vpack.c.bf16 %v371, %v371
    %v375 = vld [vmem:[%s2] sm:$0xff]
    %v376 = vld [vmem:[%s2 + $0x8] sm:$0x3]
    %v379 = vlaneseq
    %v380 = vshrl.u32 %v379, 7
    %v381 = vsub.s32 0, %v380
    %v382 = vrot.slane %v375, %v381
    %v383 = vlaneseq
    %v384 = vshrl.u32 %v383, 7
    %v385 = vsub.s32 1, %v384
    %v386 = vrot.slane %v375, %v385
    %v387 = vlaneseq
    %v388 = vshrl.u32 %v387, 7
    %v389 = vsub.s32 2, %v388
    %v390 = vrot.slane %v375, %v389
    %v391 = vlaneseq
    %v392 = vshrl.u32 %v391, 7
    %v393 = vsub.s32 3, %v392
    %v394 = vrot.slane %v375, %v393
    %v395 = vlaneseq
    %v396 = vshrl.u32 %v395, 7
    %v397 = vsub.s32 4, %v396
    %v398 = vrot.slane %v375, %v397
    %v399 = vlaneseq
    %v400 = vshrl.u32 %v399, 7
    %v401 = vsub.s32 5, %v400
    %v402 = vrot.slane %v375, %v401
    %v403 = vlaneseq
    %v404 = vshrl.u32 %v403, 7
    %v405 = vsub.s32 6, %v404
    %v406 = vrot.slane %v375, %v405
    %v407 = vlaneseq
    %v408 = vshrl.u32 %v407, 7
    %v409 = vsub.s32 7, %v408
    %v410 = vrot.slane %v375, %v409
    %v411 = vlaneseq
    %v412 = vshrl.u32 %v411, 7
    %v413 = vsub.s32 0, %v412
    %v414 = vrot.slane %v376, %v413
    %v415 = vlaneseq
    %v416 = vshrl.u32 %v415, 7
    %v417 = vsub.s32 1, %v416
    %v418 = vrot.slane %v376, %v417
    %vm429 = vcmask 130048
    %v431 = vsel %vm429, %v374, 0
    %433 = vmatprep.subr.bf16.mxu0 0
    %434 = vmatpush1.bf16.msra.mxu0 0
    %435 = vmatprep.subr.bf16.mxu0 0
    %436 = vmatpush1.bf16.msra.mxu0 0
    %437 = vmatprep.subr.bf16.mxu0 0
    %438 = vmatpush1.bf16.msra.mxu0 0
    %439 = vmatprep.subr.bf16.mxu0 0
    %440 = vmatpush1.bf16.msra.mxu0 0
    %441 = vmatprep.subr.bf16.mxu0 0
    %442 = vmatpush1.bf16.msra.mxu0 0
    %443 = vmatprep.subr.bf16.mxu0 0
    %444 = vmatpush1.bf16.msra.mxu0 0
    %445 = vmatprep.subr.bf16.mxu0 0
    %446 = vmatpush1.bf16.msra.mxu0 0
    %447 = vmatprep.subr.bf16.mxu0 %v145
    %448 = vmatpush1.bf16.msra.mxu0 %v144
    %449 = vmatprep.subr.bf16.mxu0 0
    %450 = vmatpush2.bf16.msra.mxu0 0
    %451 = vmatprep.subr.bf16.mxu0 0
    %452 = vmatpush2.bf16.msra.mxu0 0
    %453 = vmatprep.subr.bf16.mxu0 0
    %454 = vmatpush2.bf16.msra.mxu0 0
    %455 = vmatprep.subr.bf16.mxu0 0
    %456 = vmatpush2.bf16.msra.mxu0 0
    %457 = vmatprep.subr.bf16.mxu0 0
    %458 = vmatpush2.bf16.msra.mxu0 0
    %459 = vmatprep.subr.bf16.mxu0 0
    %460 = vmatpush2.bf16.msra.mxu0 0
    %461 = vmatprep.subr.bf16.mxu0 0
    %462 = vmatpush2.bf16.msra.mxu0 0
    %463 = vmatprep.subr.bf16.mxu0 0
    %464 = vmatpush2.bf16.msra.mxu0 0
    %465 = vmatprep.mubr.bf16.mxu0 0
    %466 = vmatmul.mubr.bf16.gmra.mxu0 %v431
    %v467 = vpop.f32.mrf.mxu0
    %v468 = vadd.f32 %v382, %v467
    %v469 = vpop.f32.mrf.mxu0
    %v470 = vadd.f32 %v386, %v469
    %v471 = vpop.f32.mrf.mxu0
    %v472 = vpop.f32.mrf.mxu0
    %473 = vdwg.mxu0
    %474 = vmatprep.subr.bf16.mxu0 0
    %475 = vmatpush1.bf16.msra.mxu0 0
    %476 = vmatprep.subr.bf16.mxu0 0
    %477 = vmatpush1.bf16.msra.mxu0 0
    %478 = vmatprep.subr.bf16.mxu0 0
    %479 = vmatpush1.bf16.msra.mxu0 0
    %480 = vmatprep.subr.bf16.mxu0 0
    %481 = vmatpush1.bf16.msra.mxu0 0
    %482 = vmatprep.subr.bf16.mxu0 0
    %483 = vmatpush1.bf16.msra.mxu0 0
    %484 = vmatprep.subr.bf16.mxu0 0
    %485 = vmatpush1.bf16.msra.mxu0 0
    %486 = vmatprep.subr.bf16.mxu0 0
    %487 = vmatpush1.bf16.msra.mxu0 0
    %488 = vmatprep.subr.bf16.mxu0 %v147
    %489 = vmatpush1.bf16.msra.mxu0 %v146
    %490 = vmatprep.subr.bf16.mxu0 0
    %491 = vmatpush2.bf16.msra.mxu0 0
    %492 = vmatprep.subr.bf16.mxu0 0
    %493 = vmatpush2.bf16.msra.mxu0 0
    %494 = vmatprep.subr.bf16.mxu0 0
    %495 = vmatpush2.bf16.msra.mxu0 0
    %496 = vmatprep.subr.bf16.mxu0 0
    %497 = vmatpush2.bf16.msra.mxu0 0
    %498 = vmatprep.subr.bf16.mxu0 0
    %499 = vmatpush2.bf16.msra.mxu0 0
    %500 = vmatprep.subr.bf16.mxu0 0
    %501 = vmatpush2.bf16.msra.mxu0 0
    %502 = vmatprep.subr.bf16.mxu0 0
    %503 = vmatpush2.bf16.msra.mxu0 0
    %504 = vmatprep.subr.bf16.mxu0 0
    %505 = vmatpush2.bf16.msra.mxu0 0
    %506 = vmatprep.mubr.bf16.mxu0 0
    %507 = vmatmul.mubr.bf16.gmra.mxu0 %v431
    %v508 = vpop.f32.mrf.mxu0
    %v509 = vadd.f32 %v390, %v508
    %v510 = vpop.f32.mrf.mxu0
    %v511 = vadd.f32 %v394, %v510
    %v512 = vpop.f32.mrf.mxu0
    %v513 = vpop.f32.mrf.mxu0
    %514 = vdwg.mxu0
    %515 = vmatprep.subr.bf16.mxu0 0
    %516 = vmatpush1.bf16.msra.mxu0 0
    %517 = vmatprep.subr.bf16.mxu0 0
    %518 = vmatpush1.bf16.msra.mxu0 0
    %519 = vmatprep.subr.bf16.mxu0 0
    %520 = vmatpush1.bf16.msra.mxu0 0
    %521 = vmatprep.subr.bf16.mxu0 0
    %522 = vmatpush1.bf16.msra.mxu0 0
    %523 = vmatprep.subr.bf16.mxu0 0
    %524 = vmatpush1.bf16.msra.mxu0 0
    %525 = vmatprep.subr.bf16.mxu0 0
    %526 = vmatpush1.bf16.msra.mxu0 0
    %527 = vmatprep.subr.bf16.mxu0 0
    %528 = vmatpush1.bf16.msra.mxu0 0
    %529 = vmatprep.subr.bf16.mxu0 %v149
    %530 = vmatpush1.bf16.msra.mxu0 %v148
    %531 = vmatprep.subr.bf16.mxu0 0
    %532 = vmatpush2.bf16.msra.mxu0 0
    %533 = vmatprep.subr.bf16.mxu0 0
    %534 = vmatpush2.bf16.msra.mxu0 0
    %535 = vmatprep.subr.bf16.mxu0 0
    %536 = vmatpush2.bf16.msra.mxu0 0
    %537 = vmatprep.subr.bf16.mxu0 0
    %538 = vmatpush2.bf16.msra.mxu0 0
    %539 = vmatprep.subr.bf16.mxu0 0
    %540 = vmatpush2.bf16.msra.mxu0 0
    %541 = vmatprep.subr.bf16.mxu0 0
    %542 = vmatpush2.bf16.msra.mxu0 0
    %543 = vmatprep.subr.bf16.mxu0 0
    %544 = vmatpush2.bf16.msra.mxu0 0
    %545 = vmatprep.subr.bf16.mxu0 0
    %546 = vmatpush2.bf16.msra.mxu0 0
    %547 = vmatprep.mubr.bf16.mxu0 0
    %548 = vmatmul.mubr.bf16.gmra.mxu0 %v431
    %v549 = vpop.f32.mrf.mxu0
    %v550 = vadd.f32 %v398, %v549
    %v551 = vpop.f32.mrf.mxu0
    %v552 = vadd.f32 %v402, %v551
    %v553 = vpop.f32.mrf.mxu0
    %v554 = vpop.f32.mrf.mxu0
    %555 = vdwg.mxu0
    %556 = vmatprep.subr.bf16.mxu0 0
    %557 = vmatpush1.bf16.msra.mxu0 0
    %558 = vmatprep.subr.bf16.mxu0 0
    %559 = vmatpush1.bf16.msra.mxu0 0
    %560 = vmatprep.subr.bf16.mxu0 0
    %561 = vmatpush1.bf16.msra.mxu0 0
    %562 = vmatprep.subr.bf16.mxu0 0
    %563 = vmatpush1.bf16.msra.mxu0 0
    %564 = vmatprep.subr.bf16.mxu0 0
    %565 = vmatpush1.bf16.msra.mxu0 0
    %566 = vmatprep.subr.bf16.mxu0 0
    %567 = vmatpush1.bf16.msra.mxu0 0
    %568 = vmatprep.subr.bf16.mxu0 0
    %569 = vmatpush1.bf16.msra.mxu0 0
    %570 = vmatprep.subr.bf16.mxu0 %v151
    %571 = vmatpush1.bf16.msra.mxu0 %v150
    %572 = vmatprep.subr.bf16.mxu0 0
    %573 = vmatpush2.bf16.msra.mxu0 0
    %574 = vmatprep.subr.bf16.mxu0 0
    %575 = vmatpush2.bf16.msra.mxu0 0
    %576 = vmatprep.subr.bf16.mxu0 0
    %577 = vmatpush2.bf16.msra.mxu0 0
    %578 = vmatprep.subr.bf16.mxu0 0
    %579 = vmatpush2.bf16.msra.mxu0 0
    %580 = vmatprep.subr.bf16.mxu0 0
    %581 = vmatpush2.bf16.msra.mxu0 0
    %582 = vmatprep.subr.bf16.mxu0 0
    %583 = vmatpush2.bf16.msra.mxu0 0
    %584 = vmatprep.subr.bf16.mxu0 0
    %585 = vmatpush2.bf16.msra.mxu0 0
    %586 = vmatprep.subr.bf16.mxu0 0
    %587 = vmatpush2.bf16.msra.mxu0 0
    %588 = vmatprep.mubr.bf16.mxu0 0
    %589 = vmatmul.mubr.bf16.gmra.mxu0 %v431
    %v590 = vpop.f32.mrf.mxu0
    %v591 = vadd.f32 %v406, %v590
    %v592 = vpop.f32.mrf.mxu0
    %v593 = vadd.f32 %v410, %v592
    %v594 = vpop.f32.mrf.mxu0
    %v595 = vpop.f32.mrf.mxu0
    %596 = vdwg.mxu0
    %597 = vmatprep.subr.bf16.mxu0 0
    %598 = vmatpush1.bf16.msra.mxu0 0
    %599 = vmatprep.subr.bf16.mxu0 0
    %600 = vmatpush1.bf16.msra.mxu0 0
    %601 = vmatprep.subr.bf16.mxu0 0
    %602 = vmatpush1.bf16.msra.mxu0 0
    %603 = vmatprep.subr.bf16.mxu0 0
    %604 = vmatpush1.bf16.msra.mxu0 0
    %605 = vmatprep.subr.bf16.mxu0 0
    %606 = vmatpush1.bf16.msra.mxu0 0
    %607 = vmatprep.subr.bf16.mxu0 0
    %608 = vmatpush1.bf16.msra.mxu0 0
    %609 = vmatprep.subr.bf16.mxu0 0
    %610 = vmatpush1.bf16.msra.mxu0 0
    %611 = vmatprep.subr.bf16.mxu0 %v153
    %612 = vmatpush1.bf16.msra.mxu0 %v152
    %613 = vmatprep.subr.bf16.mxu0 0
    %614 = vmatpush2.bf16.msra.mxu0 0
    %615 = vmatprep.subr.bf16.mxu0 0
    %616 = vmatpush2.bf16.msra.mxu0 0
    %617 = vmatprep.subr.bf16.mxu0 0
    %618 = vmatpush2.bf16.msra.mxu0 0
    %619 = vmatprep.subr.bf16.mxu0 0
    %620 = vmatpush2.bf16.msra.mxu0 0
    %621 = vmatprep.subr.bf16.mxu0 0
    %622 = vmatpush2.bf16.msra.mxu0 0
    %623 = vmatprep.subr.bf16.mxu0 0
    %624 = vmatpush2.bf16.msra.mxu0 0
    %625 = vmatprep.subr.bf16.mxu0 0
    %626 = vmatpush2.bf16.msra.mxu0 0
    %627 = vmatprep.subr.bf16.mxu0 0
    %628 = vmatpush2.bf16.msra.mxu0 0
    %629 = vmatprep.mubr.bf16.mxu0 0
    %630 = vmatmul.mubr.bf16.gmra.mxu0 %v431
    %v631 = vpop.f32.mrf.mxu0
    %v632 = vadd.f32 %v414, %v631
    %v633 = vpop.f32.mrf.mxu0
    %v634 = vadd.f32 %v418, %v633
    %v635 = vpop.f32.mrf.mxu0
    %v636 = vpop.f32.mrf.mxu0
    %637 = vdwg.mxu0
    %v648 = vcombine.low %v468, %v470
    %v649 = vcombine.low %v509, %v511
    %v651 = vunpack.c.l.s4 1983009808
    %v652 = vunpack.c.0.s8 %v651
    %v653 = vlaneseq
    %v654 = vshrl.u32 %v653, 7
    %v655 = vsub.s32 %v652, %v654
    %v656 = vrot.slane %v648, %v655
    %v658 = vunpack.c.l.s4 1983009808
    %v659 = vunpack.c.0.s8 %v658
    %v660 = vlaneseq
    %v661 = vshrl.u32 %v660, 7
    %v662 = vsub.s32 %v659, %v661
    %v663 = vrot.slane %v649, %v662
    %v664 = vcombine.low %v656, %v663
    %v665 = vcombine.low %v550, %v552
    %v666 = vcombine.low %v591, %v593
    %v668 = vunpack.c.l.s4 1983009808
    %v669 = vunpack.c.0.s8 %v668
    %v670 = vlaneseq
    %v671 = vshrl.u32 %v670, 7
    %v672 = vsub.s32 %v669, %v671
    %v673 = vrot.slane %v665, %v672
    %v675 = vunpack.c.l.s4 1983009808
    %v676 = vunpack.c.0.s8 %v675
    %v677 = vlaneseq
    %v678 = vshrl.u32 %v677, 7
    %v679 = vsub.s32 %v676, %v678
    %v680 = vrot.slane %v666, %v679
    %v681 = vcombine.low %v673, %v680
    %v682 = vcombine.low %v632, %v634
    %v684 = vunpack.c.l.s4 1983009808
    %v685 = vunpack.c.0.s8 %v684
    %v686 = vlaneseq
    %v687 = vshrl.u32 %v686, 7
    %v688 = vsub.s32 %v685, %v687
    %v689 = vrot.slane %v682, %v688
    %693 = vst [vmem:[#allocation5] sm:$0xff] %v664
    %694 = vst [vmem:[#allocation5 + $0x8] sm:$0xff] %v681
    %695 = vst [vmem:[#allocation5 + $0x10] sm:$0xf] %v689
    // Predicated region
    $region22: #{_pca_forward_flat.1} parent=1 // pred_check
      _
    $region23: #{_pca_forward_flat.1} parent=1 // pred_check_branch
      %697 = sbr.rel (0) target = $region25
    $region24: #{_pca_forward_flat.1} parent=1 // pred_region
      %s699 = ssub.s32 320, 320
      %700 = vsyncadd [#allocation4], %s699
      %s702 = sshll.u32 [#allocation5], 4
      %s703 = int_to_ptr.vmem [resolvable:$true] %s702
      %705 = dma.vmem_to_hbm [thread:$0]  %s703, 320, %s4, [#allocation4]
    $region25: #{_pca_forward_flat.1} parent=1 // pred_fallthru
      _
    // Predicated region
    $region26: #{_pca_forward_flat.1} parent=1 // pred_check
      _
    $region27: #{_pca_forward_flat.1} parent=1 // pred_check_branch
      %707 = sbr.rel (0) target = $region29
    $region28: #{_pca_forward_flat.1} parent=1 // pred_region
      %s709 = ssub.s32 32, 32
      %710 = vsyncadd [#allocation7], %s709
      %s712 = sshll.u32 [#allocation6], 4
      %s713 = int_to_ptr.vmem [resolvable:$true] %s712
      %715 = dma.vmem_to_hbm [thread:$0]  %s713, 32, %s5, [#allocation7]
    $region29: #{_pca_forward_flat.1} parent=1 // pred_fallthru
      _
    // Predicated region
    $region30: #{_pca_forward_flat.1} parent=1 // pred_check
      _
    $region31: #{_pca_forward_flat.1} parent=1 // pred_check_branch
      %717 = sbr.rel (0) target = $region33
    $region32: #{_pca_forward_flat.1} parent=1 // pred_region
      %718 = dma.done [#allocation4], 320
    $region33: #{_pca_forward_flat.1} parent=1 // pred_fallthru
      _
    // Predicated region
    $region34: #{_pca_forward_flat.1} parent=1 // pred_check
      _
    $region35: #{_pca_forward_flat.1} parent=1 // pred_check_branch
      %720 = sbr.rel (0) target = $region37
    $region36: #{_pca_forward_flat.1} parent=1 // pred_region
      %721 = dma.done [#allocation7], 32
    $region37: #{_pca_forward_flat.1} parent=1 // pred_fallthru
      _
    %722 = vsyncpa [#allocation3], 1
    %723 = vsyncpa [#allocation4], 1
    %724 = vsyncpa [#allocation7], 1

</llo_original>
